<compile_context>
chip_gen: v7x
topology: tpu7x:2x2x1
jax: 0.10.0
libtpu: 0.0.40
codegen_flags: <defaults>
</compile_context>

<pallas_src>
import jax
import jax.numpy as jnp
from jax import lax
from jax.experimental import pallas as pl
from jax.experimental.pallas import tpu as pltpu

_LANE = 128          # vreg lane width
_SUBLANE = 8         # f32 sublanes per vreg
_MAX_TR = 1024       # max sublane-rows per grid step (12 MiB double-buffered working set)
_MIN_SPLIT_TR = 256  # never split below this many rows per step (amortize step overhead)
_TARGET_STEPS = 8    # aim for >=8 grid steps at large N (v7x: 2 TCs x >=2 steps each)


def _round_up(x: int, m: int) -> int:
    return ((x + m - 1) // m) * m


def _choose_tile(r: int) -> tuple[int, int]:
    """Pick (tr, r_pad): rows per grid step and padded row count."""
    r8 = _round_up(r, _SUBLANE)
    # ~r8/_TARGET_STEPS rows per step, clamped to [min(_MIN_SPLIT_TR, r8), _MAX_TR]
    tr0 = min(_MAX_TR, _round_up(pl.cdiv(r8, _TARGET_STEPS), _SUBLANE))
    tr0 = max(tr0, min(_MIN_SPLIT_TR, r8))
    # re-balance to the implied step count to minimize padding waste
    steps = pl.cdiv(r8, tr0)
    tr = _round_up(pl.cdiv(r8, steps), _SUBLANE)
    r_pad = _round_up(r8, tr)
    return tr, r_pad


def _rotvec_to_rotmat_kernel(x_ref, o_ref):
    # x_ref: (3, TR, 128) f32 — component-major; each component is a vreg-dense tile.
    # o_ref: (9, TR, 128) f32 — component-major flattened 3x3 rotation matrices.
    vx = x_ref[0]
    vy = x_ref[1]
    vz = x_ref[2]

    sq = vx * vx + vy * vy + vz * vz
    small = sq < 1e-6                            # == (||v|| < 1e-3)
    safe_sq = jnp.where(small, jnp.ones_like(sq), sq)
    inv_n = lax.rsqrt(safe_sq)                   # EUP; avoids f32 sqrt + divide
    n = sq * inv_n                               # == sqrt(sq) on the non-small lanes

    # --- roma.rotvec_to_unitquat (xyzw), scipy-style small-angle Taylor expansion ---
    scale_small = 0.5 - sq / 48.0 + sq * sq / 3840.0
    scale_large = jnp.sin(0.5 * n) * inv_n
    scale = jnp.where(small, scale_small, scale_large)

    qx = scale * vx
    qy = scale * vy
    qz = scale * vz
    # cos(0.5*||v||): Taylor on the small branch (matches the reference to ~1e-16
    # instead of the previous cos(0.5*sq) approximation), exact cos elsewhere.
    qw_small = 1.0 - sq * 0.125 + sq * sq * (1.0 / 384.0)
    qw = jnp.where(small, qw_small, jnp.cos(0.5 * n))

    # --- roma.unitquat_to_rotmat — write each row directly (lane-dense stores) ---
    tx = 2.0 * qx
    ty = 2.0 * qy
    tz = 2.0 * qz
    twx = tx * qw
    twy = ty * qw
    twz = tz * qw
    txx = tx * qx
    txy = ty * qx
    txz = tz * qx
    tyy = ty * qy
    tyz = tz * qy
    tzz = tz * qz

    o_ref[0] = 1.0 - (tyy + tzz)
    o_ref[1] = txy - twz
    o_ref[2] = txz + twy
    o_ref[3] = txy + twz
    o_ref[4] = 1.0 - (txx + tzz)
    o_ref[5] = tyz - twx
    o_ref[6] = txz - twy
    o_ref[7] = tyz + twx
    o_ref[8] = 1.0 - (txx + tyy)


def _rotvec_to_rotmat_pallas(rotvec_flat: jnp.ndarray) -> jnp.ndarray:
    """rotvec_flat: (N, 3) float32  ->  (N, 3, 3) float32."""
    n = rotvec_flat.shape[0]
    r = max(1, pl.cdiv(n, _LANE))                # sublane rows needed
    tr, r_pad = _choose_tile(r)                  # rows per grid step / padded rows
    n_pad = r_pad * _LANE
    grid = r_pad // tr

    # components-major layout (3, r_pad, 128); padded lanes are zero rot-vecs
    x = jnp.pad(rotvec_flat.T, ((0, 0), (0, n_pad - n))).reshape(3, r_pad, _LANE)

    cost = pl.CostEstimate(
        flops=50 * n_pad,            # ~50 VALU ops per rotation
        transcendentals=3 * n_pad,   # rsqrt + sin + cos per rotation
        bytes_accessed=48 * n_pad,   # 12 B in + 36 B out per rotation
    )

    out = pl.pallas_call(
        _rotvec_to_rotmat_kernel,
        out_shape=jax.ShapeDtypeStruct((9, r_pad, _LANE), jnp.float32),
        grid=(grid,),
        in_specs=[pl.BlockSpec((3, tr, _LANE), lambda i: (0, i, 0))],
        out_specs=pl.BlockSpec((9, tr, _LANE), lambda i: (0, i, 0)),
        compiler_params=pltpu.CompilerParams(
            dimension_semantics=("parallel",),
            vmem_limit_bytes=32 * 1024 * 1024,   # clears v5e's 16 MiB scoped default
            allow_input_fusion=[True],           # let XLA fuse the pad/transpose in
        ),
        cost_estimate=cost,
    )(x)

    # slice off padding and restore (N, 3, 3); the component-major -> AoS interleave is
    # a single XLA transpose pass (see header comment for why it is not done in-kernel)
    return out.reshape(9, n_pad)[:, :n].T.reshape(n, 3, 3)


_rotvec_to_rotmat = jax.jit(_rotvec_to_rotmat_pallas)


class ConvertRotation:
    """JAX/Pallas port of moai ConvertRotation(src='aa', tgt='R', backend='roma')."""

    __SHAPE_MAP__ = {"rotmat": [3, 3], "rotvec": [3], "unitquat": [4]}

    def __init__(self, src: str = "aa", tgt: str = "R", backend: str = "roma"):
        # TODO(synk): only the rotvec -> rotmat conversion is implemented as a Pallas
        # kernel; the generic roma/kornia src->tgt dispatch table is not reproduced.
        self.shape = ConvertRotation.__SHAPE_MAP__["rotvec"]

    def __call__(self, rotation: jnp.ndarray) -> jnp.ndarray:
        shp = list(rotation.shape)
        if list(shp[-len(self.shape):]) != self.shape:
            # forward's `.view(B, -1, 3)` branch
            flat_trailing = 1
            for d in shp[1:]:
                flat_trailing *= d
            assert flat_trailing % 3 == 0, "flattened trailing size must be divisible by 3"
            rotation = rotation.reshape(shp[0], -1, *self.shape)
        batch_dims = rotation.shape[:-1]
        flat = rotation.reshape(-1, 3).astype(jnp.float32)  # float64 inputs are truncated
        out = _rotvec_to_rotmat(flat)
        return out.reshape(*batch_dims, 3, 3)


def _rotvec_to_rotmat_ref(rotvec: jnp.ndarray) -> jnp.ndarray:
    """Pure-JAX reference of roma.rotvec_to_rotmat for verification."""
    sq = jnp.sum(rotvec * rotvec, axis=-1, keepdims=True)
    n = jnp.sqrt(sq)
    small = n < 1e-3
    safe_n = jnp.where(small, jnp.ones_like(n), n)
    scale = jnp.where(small, 0.5 - sq / 48.0 + sq * sq / 3840.0,
                      jnp.sin(safe_n * 0.5) / safe_n)
    q = jnp.concatenate([scale * rotvec, jnp.cos(n * 0.5)], axis=-1)  # xyzw
    x, y, z, w = q[..., 0], q[..., 1], q[..., 2], q[..., 3]
    tx, ty, tz = 2 * x, 2 * y, 2 * z
    twx, twy, twz = tx * w, ty * w, tz * w
    txx, txy, txz = tx * x, ty * x, tz * x
    tyy, tyz, tzz = ty * y, tz * y, tz * z
    m = jnp.stack(
        [1 - (tyy + tzz), txy - twz, txz + twy,
         txy + twz, 1 - (txx + tzz), tyz - twx,
         txz - twy, tyz + twx, 1 - (txx + tyy)], axis=-1)
    return m.reshape(*rotvec.shape[:-1], 3, 3)


if __name__ == "__main__":
    key = jax.random.PRNGKey(0)
    # batch=2, 8 rotations each, rot-vec (axis-angle) representation
    rotvec = jax.random.normal(key, (2, 8, 3), dtype=jnp.float32)

    convert = ConvertRotation(src="aa", tgt="R", backend="roma")

    # path 1: trailing dims already match the source shape [3]
    out = jax.block_until_ready(convert(rotvec))
    assert out.shape == (2, 8, 3, 3)

    # path 2: flattened input -> forward's view(B, -1, 3) branch
    out_flat = jax.block_until_ready(convert(rotvec.reshape(2, 24)))
    assert out_flat.shape == (2, 8, 3, 3)

    ref = _rotvec_to_rotmat_ref(rotvec)
    assert jnp.allclose(out, ref, atol=1e-5, rtol=1e-5)
    assert jnp.allclose(out_flat, ref, atol=1e-5, rtol=1e-5)

    # small-angle (Taylor) branch
    tiny = rotvec * 1e-4
    out_tiny = jax.block_until_ready(convert(tiny))
    assert jnp.allclose(out_tiny, _rotvec_to_rotmat_ref(tiny), atol=1e-5, rtol=1e-5)

    # larger, non-multiple-of-128 batch to exercise the multi-step grid + padding path
    big = jax.random.normal(jax.random.PRNGKey(1), (3, 7001, 3), dtype=jnp.float32)
    out_big = jax.block_until_ready(convert(big))
    assert out_big.shape == (3, 7001, 3, 3)
    assert jnp.allclose(out_big, _rotvec_to_rotmat_ref(big), atol=1e-5, rtol=1e-5)

    print("KERNEL_OK")
</pallas_src>

<mosaic_0001>
module attributes {stable_mosaic.version = 11 : i64} {
  func.func @_rotvec_to_rotmat_kernel(%arg0: i32, %arg1: memref<3x8x128xf32, #tpu.memory_space<vmem>>, %arg2: memref<9x8x128xf32, #tpu.memory_space<vmem>>) attributes {dimension_semantics = [#tpu.dimension_semantics<parallel>], iteration_bounds = array<i64: 1>, scalar_prefetch = 0 : i64, scratch_operands = 0 : i64, tpu.core_type = #tpu.core_type<tc>, window_params = [{transform_indices = @transform_0, window_bounds = array<i64: 3, 8, 128>}, {transform_indices = @transform_1, window_bounds = array<i64: 9, 8, 128>}]} {
    %c0 = arith.constant 0 : index
    %c0_0 = arith.constant 0 : index
    %c0_1 = arith.constant 0 : index
    %0 = vector.load %arg1[%c0, %c0_0, %c0_1] : memref<3x8x128xf32, #tpu.memory_space<vmem>>, vector<1x8x128xf32>
    %1 = vector.shape_cast %0 : vector<1x8x128xf32> to vector<8x128xf32>
    %c1 = arith.constant 1 : index
    %c0_2 = arith.constant 0 : index
    %c0_3 = arith.constant 0 : index
    %2 = vector.load %arg1[%c1, %c0_2, %c0_3] : memref<3x8x128xf32, #tpu.memory_space<vmem>>, vector<1x8x128xf32>
    %3 = vector.shape_cast %2 : vector<1x8x128xf32> to vector<8x128xf32>
    %c2 = arith.constant 2 : index
    %c0_4 = arith.constant 0 : index
    %c0_5 = arith.constant 0 : index
    %4 = vector.load %arg1[%c2, %c0_4, %c0_5] : memref<3x8x128xf32, #tpu.memory_space<vmem>>, vector<1x8x128xf32>
    %5 = vector.shape_cast %4 : vector<1x8x128xf32> to vector<8x128xf32>
    %6 = arith.mulf %1, %1 : vector<8x128xf32>
    %7 = arith.mulf %3, %3 : vector<8x128xf32>
    %8 = arith.addf %6, %7 : vector<8x128xf32>
    %9 = arith.mulf %5, %5 : vector<8x128xf32>
    %10 = arith.addf %8, %9 : vector<8x128xf32>
    %cst = arith.constant 9.99999997E-7 : f32
    %11 = vector.broadcast %cst : f32 to vector<8x128xf32>
    %12 = arith.cmpf olt, %10, %11 : vector<8x128xf32>
    %cst_6 = arith.constant 1.000000e+00 : f32
    %13 = vector.broadcast %cst_6 : f32 to vector<8x128xf32>
    %14 = arith.select %12, %13, %10 : vector<8x128xi1>, vector<8x128xf32>
    %15 = math.rsqrt %14 : vector<8x128xf32>
    %16 = arith.mulf %10, %15 : vector<8x128xf32>
    %cst_7 = arith.constant 4.800000e+01 : f32
    %17 = vector.broadcast %cst_7 : f32 to vector<8x128xf32>
    %18 = arith.divf %10, %17 : vector<8x128xf32>
    %cst_8 = arith.constant 5.000000e-01 : f32
    %19 = vector.broadcast %cst_8 : f32 to vector<8x128xf32>
    %20 = arith.subf %19, %18 : vector<8x128xf32>
    %21 = arith.mulf %10, %10 : vector<8x128xf32>
    %cst_9 = arith.constant 3.840000e+03 : f32
    %22 = vector.broadcast %cst_9 : f32 to vector<8x128xf32>
    %23 = arith.divf %21, %22 : vector<8x128xf32>
    %24 = arith.addf %20, %23 : vector<8x128xf32>
    %cst_10 = arith.constant 5.000000e-01 : f32
    %25 = vector.broadcast %cst_10 : f32 to vector<8x128xf32>
    %26 = arith.mulf %25, %16 : vector<8x128xf32>
    %27 = math.sin %26 : vector<8x128xf32>
    %28 = arith.mulf %27, %15 : vector<8x128xf32>
    %29 = arith.select %12, %24, %28 : vector<8x128xi1>, vector<8x128xf32>
    %30 = arith.mulf %29, %1 : vector<8x128xf32>
    %31 = arith.mulf %29, %3 : vector<8x128xf32>
    %32 = arith.mulf %29, %5 : vector<8x128xf32>
    %cst_11 = arith.constant 1.250000e-01 : f32
    %33 = vector.broadcast %cst_11 : f32 to vector<8x128xf32>
    %34 = arith.mulf %10, %33 : vector<8x128xf32>
    %cst_12 = arith.constant 1.000000e+00 : f32
    %35 = vector.broadcast %cst_12 : f32 to vector<8x128xf32>
    %36 = arith.subf %35, %34 : vector<8x128xf32>
    %37 = arith.mulf %10, %10 : vector<8x128xf32>
    %cst_13 = arith.constant 0.00260416674 : f32
    %38 = vector.broadcast %cst_13 : f32 to vector<8x128xf32>
    %39 = arith.mulf %37, %38 : vector<8x128xf32>
    %40 = arith.addf %36, %39 : vector<8x128xf32>
    %cst_14 = arith.constant 5.000000e-01 : f32
    %41 = vector.broadcast %cst_14 : f32 to vector<8x128xf32>
    %42 = arith.mulf %41, %16 : vector<8x128xf32>
    %43 = math.cos %42 : vector<8x128xf32>
    %44 = arith.select %12, %40, %43 : vector<8x128xi1>, vector<8x128xf32>
    %cst_15 = arith.constant 2.000000e+00 : f32
    %45 = vector.broadcast %cst_15 : f32 to vector<8x128xf32>
    %46 = arith.mulf %45, %30 : vector<8x128xf32>
    %cst_16 = arith.constant 2.000000e+00 : f32
    %47 = vector.broadcast %cst_16 : f32 to vector<8x128xf32>
    %48 = arith.mulf %47, %31 : vector<8x128xf32>
    %cst_17 = arith.constant 2.000000e+00 : f32
    %49 = vector.broadcast %cst_17 : f32 to vector<8x128xf32>
    %50 = arith.mulf %49, %32 : vector<8x128xf32>
    %51 = arith.mulf %46, %44 : vector<8x128xf32>
    %52 = arith.mulf %48, %44 : vector<8x128xf32>
    %53 = arith.mulf %50, %44 : vector<8x128xf32>
    %54 = arith.mulf %46, %30 : vector<8x128xf32>
    %55 = arith.mulf %48, %30 : vector<8x128xf32>
    %56 = arith.mulf %50, %30 : vector<8x128xf32>
    %57 = arith.mulf %48, %31 : vector<8x128xf32>
    %58 = arith.mulf %50, %31 : vector<8x128xf32>
    %59 = arith.mulf %50, %32 : vector<8x128xf32>
    %60 = arith.addf %57, %59 : vector<8x128xf32>
    %cst_18 = arith.constant 1.000000e+00 : f32
    %61 = vector.broadcast %cst_18 : f32 to vector<8x128xf32>
    %62 = arith.subf %61, %60 : vector<8x128xf32>
    %c0_19 = arith.constant 0 : index
    %c0_20 = arith.constant 0 : index
    %c0_21 = arith.constant 0 : index
    %63 = vector.load %arg2[%c0_19, %c0_20, %c0_21] : memref<9x8x128xf32, #tpu.memory_space<vmem>>, vector<1x8x128xf32>
    %64 = vector.shape_cast %63 : vector<1x8x128xf32> to vector<8x128xf32>
    %65 = vector.shape_cast %62 : vector<8x128xf32> to vector<1x8x128xf32>
    tpu.vector_store %arg2[%c0_19, %c0_20, %c0_21], %65 {strides = array<i32>} : memref<9x8x128xf32, #tpu.memory_space<vmem>>, vector<1x8x128xf32>,
    %66 = arith.subf %55, %53 : vector<8x128xf32>
    %c1_22 = arith.constant 1 : index
    %c0_23 = arith.constant 0 : index
    %c0_24 = arith.constant 0 : index
    %67 = vector.load %arg2[%c1_22, %c0_23, %c0_24] : memref<9x8x128xf32, #tpu.memory_space<vmem>>, vector<1x8x128xf32>
    %68 = vector.shape_cast %67 : vector<1x8x128xf32> to vector<8x128xf32>
    %69 = vector.shape_cast %66 : vector<8x128xf32> to vector<1x8x128xf32>
    tpu.vector_store %arg2[%c1_22, %c0_23, %c0_24], %69 {strides = array<i32>} : memref<9x8x128xf32, #tpu.memory_space<vmem>>, vector<1x8x128xf32>,
    %70 = arith.addf %56, %52 : vector<8x128xf32>
    %c2_25 = arith.constant 2 : index
    %c0_26 = arith.constant 0 : index
    %c0_27 = arith.constant 0 : index
    %71 = vector.load %arg2[%c2_25, %c0_26, %c0_27] : memref<9x8x128xf32, #tpu.memory_space<vmem>>, vector<1x8x128xf32>
    %72 = vector.shape_cast %71 : vector<1x8x128xf32> to vector<8x128xf32>
    %73 = vector.shape_cast %70 : vector<8x128xf32> to vector<1x8x128xf32>
    tpu.vector_store %arg2[%c2_25, %c0_26, %c0_27], %73 {strides = array<i32>} : memref<9x8x128xf32, #tpu.memory_space<vmem>>, vector<1x8x128xf32>,
    %74 = arith.addf %55, %53 : vector<8x128xf32>
    %c3 = arith.constant 3 : index
    %c0_28 = arith.constant 0 : index
    %c0_29 = arith.constant 0 : index
    %75 = vector.load %arg2[%c3, %c0_28, %c0_29] : memref<9x8x128xf32, #tpu.memory_space<vmem>>, vector<1x8x128xf32>
    %76 = vector.shape_cast %75 : vector<1x8x128xf32> to vector<8x128xf32>
    %77 = vector.shape_cast %74 : vector<8x128xf32> to vector<1x8x128xf32>
    tpu.vector_store %arg2[%c3, %c0_28, %c0_29], %77 {strides = array<i32>} : memref<9x8x128xf32, #tpu.memory_space<vmem>>, vector<1x8x128xf32>,
    %78 = arith.addf %54, %59 : vector<8x128xf32>
    %cst_30 = arith.constant 1.000000e+00 : f32
    %79 = vector.broadcast %cst_30 : f32 to vector<8x128xf32>
    %80 = arith.subf %79, %78 : vector<8x128xf32>
    %c4 = arith.constant 4 : index
    %c0_31 = arith.constant 0 : index
    %c0_32 = arith.constant 0 : index
    %81 = vector.load %arg2[%c4, %c0_31, %c0_32] : memref<9x8x128xf32, #tpu.memory_space<vmem>>, vector<1x8x128xf32>
    %82 = vector.shape_cast %81 : vector<1x8x128xf32> to vector<8x128xf32>
    %83 = vector.shape_cast %80 : vector<8x128xf32> to vector<1x8x128xf32>
    tpu.vector_store %arg2[%c4, %c0_31, %c0_32], %83 {strides = array<i32>} : memref<9x8x128xf32, #tpu.memory_space<vmem>>, vector<1x8x128xf32>,
    %84 = arith.subf %58, %51 : vector<8x128xf32>
    %c5 = arith.constant 5 : index
    %c0_33 = arith.constant 0 : index
    %c0_34 = arith.constant 0 : index
    %85 = vector.load %arg2[%c5, %c0_33, %c0_34] : memref<9x8x128xf32, #tpu.memory_space<vmem>>, vector<1x8x128xf32>
    %86 = vector.shape_cast %85 : vector<1x8x128xf32> to vector<8x128xf32>
    %87 = vector.shape_cast %84 : vector<8x128xf32> to vector<1x8x128xf32>
    tpu.vector_store %arg2[%c5, %c0_33, %c0_34], %87 {strides = array<i32>} : memref<9x8x128xf32, #tpu.memory_space<vmem>>, vector<1x8x128xf32>,
    %88 = arith.subf %56, %52 : vector<8x128xf32>
    %c6 = arith.constant 6 : index
    %c0_35 = arith.constant 0 : index
    %c0_36 = arith.constant 0 : index
    %89 = vector.load %arg2[%c6, %c0_35, %c0_36] : memref<9x8x128xf32, #tpu.memory_space<vmem>>, vector<1x8x128xf32>
    %90 = vector.shape_cast %89 : vector<1x8x128xf32> to vector<8x128xf32>
    %91 = vector.shape_cast %88 : vector<8x128xf32> to vector<1x8x128xf32>
    tpu.vector_store %arg2[%c6, %c0_35, %c0_36], %91 {strides = array<i32>} : memref<9x8x128xf32, #tpu.memory_space<vmem>>, vector<1x8x128xf32>,
    %92 = arith.addf %58, %51 : vector<8x128xf32>
    %c7 = arith.constant 7 : index
    %c0_37 = arith.constant 0 : index
    %c0_38 = arith.constant 0 : index
    %93 = vector.load %arg2[%c7, %c0_37, %c0_38] : memref<9x8x128xf32, #tpu.memory_space<vmem>>, vector<1x8x128xf32>
    %94 = vector.shape_cast %93 : vector<1x8x128xf32> to vector<8x128xf32>
    %95 = vector.shape_cast %92 : vector<8x128xf32> to vector<1x8x128xf32>
    tpu.vector_store %arg2[%c7, %c0_37, %c0_38], %95 {strides = array<i32>} : memref<9x8x128xf32, #tpu.memory_space<vmem>>, vector<1x8x128xf32>,
    %96 = arith.addf %54, %57 : vector<8x128xf32>
    %cst_39 = arith.constant 1.000000e+00 : f32
    %97 = vector.broadcast %cst_39 : f32 to vector<8x128xf32>
    %98 = arith.subf %97, %96 : vector<8x128xf32>
    %c8 = arith.constant 8 : index
    %c0_40 = arith.constant 0 : index
    %c0_41 = arith.constant 0 : index
    %99 = vector.load %arg2[%c8, %c0_40, %c0_41] : memref<9x8x128xf32, #tpu.memory_space<vmem>>, vector<1x8x128xf32>
    %100 = vector.shape_cast %99 : vector<1x8x128xf32> to vector<8x128xf32>
    %101 = vector.shape_cast %98 : vector<8x128xf32> to vector<1x8x128xf32>
    tpu.vector_store %arg2[%c8, %c0_40, %c0_41], %101 {strides = array<i32>} : memref<9x8x128xf32, #tpu.memory_space<vmem>>, vector<1x8x128xf32>,
    return
  }
  func.func @transform_0(%arg0: i32) -> (i32, i32, i32) {
    %c0_i32 = arith.constant 0 : i32
    %c0_i32_0 = arith.constant 0 : i32
    %c0_i32_1 = arith.constant 0 : i32
    return %c0_i32, %arg0, %c0_i32_0 : i32, i32, i32
  }
  func.func @transform_1(%arg0: i32) -> (i32, i32, i32) {
    %c0_i32 = arith.constant 0 : i32
    %c0_i32_0 = arith.constant 0 : i32
    %c0_i32_1 = arith.constant 0 : i32
    return %c0_i32, %arg0, %c0_i32_0 : i32, i32, i32
  }
}

</mosaic_0001>

<llo_original>
// kernel: _rotvec_to_rotmat_pallas.2
$region0: #{_rotvec_to_rotmat_pallas.2}
  #allocation0 [shape = 'u32[]', space=smem, size = 0x4, offset = 0x4, fixed_abs, tag = 'smem constant byte address 0x4 - core index']
  #allocation1 [shape = 'u32[144,128]{1,0:T(1,128)}', space=vmem, size = 0x12000, scoped, tag = 'internal scratch']
  %s0 = inlined_call_operand.vmem [shape: f32[1,3,8,128], index: 0, kind: input, shape index: {}]
  %s1 = inlined_call_operand.vmem [shape: f32[9,8,128], index: 1, kind: output, shape index: {}]
  %s2 = sld [smem:[#allocation0]]
  $region14: #{_rotvec_to_rotmat_pallas.2} parent=0
    _
  %s4 = ssub.s32 1, %s2
  %s5 = scalar_select 0, %s4, %s2
  $region1: #{_rotvec_to_rotmat_pallas.2} parent=0
    #allocation2 [shape = 'u8[12288]{0}', space=vmem, size = 0x3000, dematerialized = true, scoped, tag = 'FusionAdapter Buffer %fusion.1 = f32[3,8,128]{2,1,0:T(8,128)} fusion(%param_0.3), kind=kLoop, calls=%fused_computation.2.clone, metadata={op_name="jit(_rotvec_to_rotmat_pallas)/reshape" stack_frame_id=10}']
    // Predicated region
    $region2: #{_rotvec_to_rotmat_pallas.2} parent=1 // pred_check
      _
    $region3: #{_rotvec_to_rotmat_pallas.2} parent=1 // pred_check_branch
      %7 = sbr.rel (0) target = $region5
    $region4: #{_rotvec_to_rotmat_pallas.2} parent=1 // pred_region
      _
    $region5: #{_rotvec_to_rotmat_pallas.2} parent=1 // pred_fallthru
      _
    %v8 = vld [vmem:[%s0] sm:$0xff]
    %10 = vst [vmem:[#allocation2] sm:$0xff] %v8
    %s11 = scalar_lea.vmem %s0, 8
    %v12 = vld [vmem:[%s11] sm:$0xff]
    %s13 = scalar_lea.vmem [#allocation2], 8
    %15 = vst [vmem:[%s13] sm:$0xff] %v12
    %s16 = scalar_lea.vmem %s0, 16
    %v17 = vld [vmem:[%s16] sm:$0xff]
    %s18 = scalar_lea.vmem [#allocation2], 16
    %20 = vst [vmem:[%s18] sm:$0xff] %v17
    %v21 = vld [vmem:[#allocation2] sm:$0xff]
    %s22 = scalar_lea.vmem [#allocation2], 8
    %v23 = vld [vmem:[%s22] sm:$0xff]
    %s24 = scalar_lea.vmem [#allocation2], 16
    %v25 = vld [vmem:[%s24] sm:$0xff]
    %v26 = vmul.f32 %v21, %v21
    %v27 = vmul.f32 %v23, %v23
    %v28 = vadd.f32 %v26, %v27
    %v29 = vmul.f32 %v25, %v25
    %v30 = vadd.f32 %v28, %v29
    %vm31 = vcmp.lt.f32.partialorder %v30, 1e-06
    %v32 = vsel %vm31, 1.0, %v30
    %v33 = vrsqrt.pop %v32
    %v34 = vmul.f32 %v30, %v33
    %v35 = vrcp.pop 48.0
    %v36 = vmul.f32 %v30, %v35
    %v37 = vsub.f32 0.5, %v36
    %v38 = vmul.f32 %v30, %v30
    %v39 = vrcp.pop 3840.0
    %v40 = vmul.f32 %v38, %v39
    %v41 = vadd.f32 %v37, %v40
    %v42 = vmul.f32 %v34, 0.5
    %v43 = vand.u32 2147483647, %v42
    %vm44 = vcmp.le.f32.partialorder %v43, 0.7853982
    %vm45 = vcmp.lt.s32.totalorder %v42, 0
    %v46 = vand.u32 %v42, 2139095040
    %v47 = vshrl.u32 %v46, 23
    %v48 = vsub.s32 %v47, 127
    %v49 = vand.u32 2147483647, %v42
    %v50 = vand.u32 %v49, 8388607
    %v51 = vor.u32 %v50, 8388608
    %v52 = vsub.s32 0, %v51
    %v53 = vadd.s32 %v48, 1
    %vm54 = vcmp.gt.s32.totalorder %v53, 0
    %v55 = vsel %vm54, %v53, 0
    %v56 = vshrl.u32 %v55, 5
    %v57 = vand.u32 %v55, 31
    %v58 = vsub.s32 32, %v57
    %v59 = vshrl.u32 683565275, %v58
    %v60 = vshll.u32 683565275, %v57
    %v61 = vshrl.u32 2475754826, %v58
    %v62 = vor.u32 %v60, %v61
    %v63 = vshll.u32 2475754826, %v57
    %v64 = vshrl.u32 2131351028, %v58
    %v65 = vor.u32 %v63, %v64
    %v66 = vshll.u32 2131351028, %v57
    %v67 = vshrl.u32 2102212464, %v58
    %v68 = vor.u32 %v66, %v67
    %v69 = vshll.u32 2102212464, %v57
    %v70 = vshrl.u32 920167782, %v58
    %v71 = vor.u32 %v69, %v70
    %v72 = vshll.u32 920167782, %v57
    %v73 = vshrl.u32 1326507024, %v58
    %v74 = vor.u32 %v72, %v73
    %vm75 = vcmp.lt.s32.totalorder %v56, 1
    %vm76 = vcmp.lt.s32.totalorder %v56, 2
    %vm77 = vcmp.lt.s32.totalorder %v56, 3
    %vm78 = vcmp.lt.s32.totalorder %v56, 4
    %v79 = vsel %vm75, %v59, %v62
    %v80 = vsel %vm78, %v68, 2102212464
    %v81 = vsel %vm77, %v65, %v80
    %v82 = vsel %vm76, %v79, %v81
    %v83 = vsel %vm75, %v62, %v65
    %v84 = vsel %vm78, %v71, 920167782
    %v85 = vsel %vm77, %v68, %v84
    %v86 = vsel %vm76, %v83, %v85
    %v87 = vsel %vm75, %v65, %v68
    %v88 = vsel %vm78, %v74, 1326507024
    %v89 = vsel %vm77, %v71, %v88
    %v90 = vsel %vm76, %v87, %v89
    %v91 = vshll.u32 %v51, 8
    %v92 = vmul.u32.u64.compose %v91, %v90
    %v93 = vextract.low.u32 %v92
    %v94 = vextract.high.u32 %v92
    %v95 = vmul.u32.u64.compose %v91, %v86
    %v96 = vextract.low.u32 %v95
    %v97 = vextract.high.u32 %v95
    %v98 = vmul.u32 %v91, %v82
    %v99 = vadd.s32 %v94, %v96
    %vm100 = vc.u32 %v94, %v96
    %v101 = vadd.s32 %v97, 1
    %v102 = vsel %vm100, %v101, %v97
    %v103 = vadd.s32 %v98, %v102
    %v104 = vadd.s32 %v103, 536870912
    %v105 = vshrl.u32 %v104, 30
    %v106 = vshll.u32 %v105, 30
    %v107 = vsub.s32 %v103, %v106
    %vm108 = vcmp.lt.s32.totalorder %v107, 0
    %v109 = vsub.s32 0, %v107
    %v110 = vsel %vm108, %v109, %v107
    %v111 = vclz %v110
    %v112 = vsub.s32 %v111, 2
    %vm113 = vcmp.gt.s32.totalorder 0, %v112
    %v114 = vsel %vm113, 0, %v112
    %v115 = vsub.s32 32, %v114
    %v116 = vshll.u32 %v107, %v114
    %v117 = vshrl.u32 %v99, %v115
    %v118 = vor.u32 %v116, %v117
    %v119 = vsub.s32 4294967266, %v114
    %v120 = vadd.s32 %v119, 127
    %v121 = vshll.u32 %v120, 23
    %v122 = vor.u32 4788187, %v121
    %v123 = vand.u32 2147483647, %v122
    %v125 = vcvt.s32.f32 %v118
    %v126 = vmul.f32 %v125, %v123
    %v127 = vxor.u32 %v126, 2147483648
    %v128 = vsel %vm45, %v127, %v126
    %v129 = vsub.s32 4, %v105
    %v130 = vsel %vm45, %v129, %v105
    %v131 = vsel %vm44, %v42, %v128
    %v132 = vsel %vm44, 0, %v130
    %v133 = vcosq.f32.pop %v131
    %v134 = vsinq.f32.pop %v131
    %vm135 = vweird.f32 %v42
    %v136 = vadd.s32 %v132, 3
    %v137 = vand.u32 %v136, 3
    %vm138 = vcmp.lt.s32.totalorder %v137, 2
    %vm139 = vcmp.eq.s32.totalorder %v137, 0
    %v140 = vxor.u32 %v134, 2147483648
    %v141 = vsel %vm139, %v133, %v140
    %vm142 = vcmp.eq.s32.totalorder %v137, 2
    %v143 = vxor.u32 %v133, 2147483648
    %v144 = vsel %vm142, %v143, %v134
    %v145 = vsel %vm138, %v141, %v144
    %v146 = vsel %vm135, nan, %v145
    %v147 = vmul.f32 %v146, %v33
    %v148 = vsel %vm31, %v41, %v147
    %v149 = vmul.f32 %v148, %v21
    %v150 = vmul.f32 %v148, %v23
    %v151 = vmul.f32 %v148, %v25
    %v152 = vmul.f32 %v30, 0.125
    %v153 = vsub.f32 1.0, %v152
    %v154 = vmul.f32 %v38, 0.0026041667
    %v155 = vadd.f32 %v153, %v154
    %v156 = vand.u32 2147483647, %v42
    %vm157 = vcmp.le.f32.partialorder %v156, 0.7853982
    %vm158 = vcmp.lt.s32.totalorder %v42, 0
    %v159 = vand.u32 %v42, 2139095040
    %v160 = vshrl.u32 %v159, 23
    %v161 = vsub.s32 %v160, 127
    %v162 = vand.u32 2147483647, %v42
    %v163 = vand.u32 %v162, 8388607
    %v164 = vor.u32 %v163, 8388608
    %v165 = vsub.s32 0, %v164
    %v166 = vadd.s32 %v161, 1
    %vm167 = vcmp.gt.s32.totalorder %v166, 0
    %v168 = vsel %vm167, %v166, 0
    %v169 = vshrl.u32 %v168, 5
    %v170 = vand.u32 %v168, 31
    %v171 = vsub.s32 32, %v170
    %v172 = vshrl.u32 683565275, %v171
    %v173 = vshll.u32 683565275, %v170
    %v174 = vshrl.u32 2475754826, %v171
    %v175 = vor.u32 %v173, %v174
    %v176 = vshll.u32 2475754826, %v170
    %v177 = vshrl.u32 2131351028, %v171
    %v178 = vor.u32 %v176, %v177
    %v179 = vshll.u32 2131351028, %v170
    %v180 = vshrl.u32 2102212464, %v171
    %v181 = vor.u32 %v179, %v180
    %v182 = vshll.u32 2102212464, %v170
    %v183 = vshrl.u32 920167782, %v171
    %v184 = vor.u32 %v182, %v183
    %v185 = vshll.u32 920167782, %v170
    %v186 = vshrl.u32 1326507024, %v171
    %v187 = vor.u32 %v185, %v186
    %vm188 = vcmp.lt.s32.totalorder %v169, 1
    %vm189 = vcmp.lt.s32.totalorder %v169, 2
    %vm190 = vcmp.lt.s32.totalorder %v169, 3
    %vm191 = vcmp.lt.s32.totalorder %v169, 4
    %v192 = vsel %vm188, %v172, %v175
    %v193 = vsel %vm191, %v181, 2102212464
    %v194 = vsel %vm190, %v178, %v193
    %v195 = vsel %vm189, %v192, %v194
    %v196 = vsel %vm188, %v175, %v178
    %v197 = vsel %vm191, %v184, 920167782
    %v198 = vsel %vm190, %v181, %v197
    %v199 = vsel %vm189, %v196, %v198
    %v200 = vsel %vm188, %v178, %v181
    %v201 = vsel %vm191, %v187, 1326507024
    %v202 = vsel %vm190, %v184, %v201
    %v203 = vsel %vm189, %v200, %v202
    %v204 = vshll.u32 %v164, 8
    %v205 = vmul.u32.u64.compose %v204, %v203
    %v206 = vextract.low.u32 %v205
    %v207 = vextract.high.u32 %v205
    %v208 = vmul.u32.u64.compose %v204, %v199
    %v209 = vextract.low.u32 %v208
    %v210 = vextract.high.u32 %v208
    %v211 = vmul.u32 %v204, %v195
    %v212 = vadd.s32 %v207, %v209
    %vm213 = vc.u32 %v207, %v209
    %v214 = vadd.s32 %v210, 1
    %v215 = vsel %vm213, %v214, %v210
    %v216 = vadd.s32 %v211, %v215
    %v217 = vadd.s32 %v216, 536870912
    %v218 = vshrl.u32 %v217, 30
    %v219 = vshll.u32 %v218, 30
    %v220 = vsub.s32 %v216, %v219
    %vm221 = vcmp.lt.s32.totalorder %v220, 0
    %v222 = vsub.s32 0, %v220
    %v223 = vsel %vm221, %v222, %v220
    %v224 = vclz %v223
    %v225 = vsub.s32 %v224, 2
    %vm226 = vcmp.gt.s32.totalorder 0, %v225
    %v227 = vsel %vm226, 0, %v225
    %v228 = vsub.s32 32, %v227
    %v229 = vshll.u32 %v220, %v227
    %v230 = vshrl.u32 %v212, %v228
    %v231 = vor.u32 %v229, %v230
    %v232 = vsub.s32 4294967266, %v227
    %v233 = vadd.s32 %v232, 127
    %v234 = vshll.u32 %v233, 23
    %v235 = vor.u32 4788187, %v234
    %v236 = vand.u32 2147483647, %v235
    %v238 = vcvt.s32.f32 %v231
    %v239 = vmul.f32 %v238, %v236
    %v240 = vxor.u32 %v239, 2147483648
    %v241 = vsel %vm158, %v240, %v239
    %v242 = vsub.s32 4, %v218
    %v243 = vsel %vm158, %v242, %v218
    %v244 = vsel %vm157, %v42, %v241
    %v245 = vsel %vm157, 0, %v243
    %v246 = vcosq.f32.pop %v244
    %v247 = vsinq.f32.pop %v244
    %vm248 = vweird.f32 %v42
    %v249 = vand.u32 %v245, 3
    %vm250 = vcmp.lt.s32.totalorder %v249, 2
    %vm251 = vcmp.eq.s32.totalorder %v249, 0
    %v252 = vxor.u32 %v247, 2147483648
    %v253 = vsel %vm251, %v246, %v252
    %vm254 = vcmp.eq.s32.totalorder %v249, 2
    %v255 = vxor.u32 %v246, 2147483648
    %v256 = vsel %vm254, %v255, %v247
    %v257 = vsel %vm250, %v253, %v256
    %v258 = vsel %vm248, nan, %v257
    %v259 = vsel %vm31, %v155, %v258
    %v260 = vmul.f32 %v149, 2.0
    %v261 = vmul.f32 %v150, 2.0
    %v262 = vmul.f32 %v151, 2.0
    %v263 = vmul.f32 %v260, %v259
    %v264 = vmul.f32 %v261, %v259
    %v265 = vmul.f32 %v262, %v259
    %v266 = vmul.f32 %v260, %v149
    %v267 = vmul.f32 %v261, %v149
    %v268 = vmul.f32 %v262, %v149
    %v269 = vmul.f32 %v261, %v150
    %v270 = vmul.f32 %v262, %v150
    %v271 = vmul.f32 %v262, %v151
    %v272 = vadd.f32 %v269, %v271
    %v273 = vsub.f32 1.0, %v272
    %274 = vst [vmem:[%s1] sm:$0xff] %v273
    %v275 = vsub.f32 %v267, %v265
    %s276 = scalar_lea.vmem %s1, 8
    %277 = vst [vmem:[%s276] sm:$0xff] %v275
    %v278 = vadd.f32 %v268, %v264
    %s279 = scalar_lea.vmem %s1, 16
    %280 = vst [vmem:[%s279] sm:$0xff] %v278
    %v281 = vadd.f32 %v267, %v265
    %s282 = scalar_lea.vmem %s1, 24
    %283 = vst [vmem:[%s282] sm:$0xff] %v281
    %v284 = vadd.f32 %v266, %v271
    %v285 = vsub.f32 1.0, %v284
    %s286 = scalar_lea.vmem %s1, 32
    %287 = vst [vmem:[%s286] sm:$0xff] %v285
    %v288 = vsub.f32 %v270, %v263
    %s289 = scalar_lea.vmem %s1, 40
    %290 = vst [vmem:[%s289] sm:$0xff] %v288
    %v291 = vsub.f32 %v268, %v264
    %s292 = scalar_lea.vmem %s1, 48
    %293 = vst [vmem:[%s292] sm:$0xff] %v291
    %v294 = vadd.f32 %v270, %v263
    %s295 = scalar_lea.vmem %s1, 56
    %296 = vst [vmem:[%s295] sm:$0xff] %v294
    %v297 = vadd.f32 %v266, %v269
    %v298 = vsub.f32 1.0, %v297
    %s299 = scalar_lea.vmem %s1, 64
    %300 = vst [vmem:[%s299] sm:$0xff] %v298
    // Predicated region
    $region6: #{_rotvec_to_rotmat_pallas.2} parent=1 // pred_check
      _
    $region7: #{_rotvec_to_rotmat_pallas.2} parent=1 // pred_check_branch
      %302 = sbr.rel (0) target = $region9
    $region8: #{_rotvec_to_rotmat_pallas.2} parent=1 // pred_region
      _
    $region9: #{_rotvec_to_rotmat_pallas.2} parent=1 // pred_fallthru
      _
    // Predicated region
    $region10: #{_rotvec_to_rotmat_pallas.2} parent=1 // pred_check
      _
    $region11: #{_rotvec_to_rotmat_pallas.2} parent=1 // pred_check_branch
      %304 = sbr.rel (0) target = $region13
    $region12: #{_rotvec_to_rotmat_pallas.2} parent=1 // pred_region
      _
    $region13: #{_rotvec_to_rotmat_pallas.2} parent=1 // pred_fallthru
      _

</llo_original>
